<compile_context>
chip_gen: v7x
topology: tpu7x:2x2x1
jax: 0.10.0
libtpu: 0.0.40
codegen_flags: <defaults>
</compile_context>

<pallas_src>
import functools

import numpy as np
import jax
import jax.numpy as jnp
from jax.experimental import pallas as pl
from jax.experimental.pallas import tpu as pltpu


def _round_up(v, m):
    return ((v + m - 1) // m) * m


def _policy_kernel(in_pad, pw, x_ref, wp_ref, out_ref):
    """Fused critic+actor MLP on one batch tile: three bf16 matmuls (f32 acc),
    one lane-dense f32 store.

    wp_ref (bf16) row layout (all offsets multiples of 16 = bf16 sublane tile):
      [0 : in_pad]                    W1 = [critic_w1 | actor_w1 | 0]        (in_pad, pw)
      [in_pad : in_pad+pw]            W2 = blockdiag(critic_w2, actor_w2, 0) (pw, pw)
      [in_pad+pw : in_pad+2pw]        W3 = [critic_lin_w in col 0,
                                            actor_w3 in cols 1..2A, 0]       (pw, pw)
      [in_pad+2pw : in_pad+2pw+16]    rows 0/1/2 = lane-packed biases b1/b2/b3
    Output tile: (bt, pw) f32 slab; lane 0 = value, lanes 1..2A = softplus(z)+1.
    """
    w1 = wp_ref[0:in_pad, :]
    w2 = wp_ref[in_pad:in_pad + pw, :]
    w3 = wp_ref[in_pad + pw:in_pad + 2 * pw, :]
    bias = wp_ref[in_pad + 2 * pw:in_pad + 2 * pw + 16, :].astype(jnp.float32)
    b1 = bias[0:1, :]
    b2 = bias[1:2, :]
    b3 = bias[2:3, :]

    # layer 1: shared matmul for both trunks (critic lanes 0..H-1, actor lanes H..2H-1)
    x = x_ref[...].astype(jnp.bfloat16)
    h = jnp.maximum(jnp.dot(x, w1, preferred_element_type=jnp.float32) + b1, 0.0)
    # layer 2: block-diagonal keeps the two trunks independent
    h = jnp.maximum(
        jnp.dot(h.astype(jnp.bfloat16), w2, preferred_element_type=jnp.float32) + b2, 0.0)
    # layer 3: packed head -> lane 0 = value, lanes 1..2A = actor pre-activation
    z = jnp.dot(h.astype(jnp.bfloat16), w3, preferred_element_type=jnp.float32) + b3

    sp = jax.nn.softplus(z) + 1.0                      # transcendental -> EUP slot
    lane = jax.lax.broadcasted_iota(jnp.int32, z.shape, 1)
    out_ref[...] = jnp.where(lane == 0, z, sp)         # lane 0 keeps raw value


def pack_params(params, num_inputs, num_actions, hidden_size):
    """Pack the 12 per-layer arrays into ONE bf16 slab (weights + biases).

    Call ONCE at init / whenever params change; do not call per forward step.
    """
    H, A = hidden_size, num_actions
    in_pad = _round_up(num_inputs, 16)                         # bf16 sublane tile = 16
    pw = max(128, _round_up(2 * H, 128), _round_up(1 + 2 * A, 128))

    w1 = jnp.zeros((in_pad, pw), jnp.float32)
    w1 = w1.at[:num_inputs, :H].set(params["critic_w1"])
    w1 = w1.at[:num_inputs, H:2 * H].set(params["actor_w1"])

    w2 = jnp.zeros((pw, pw), jnp.float32)
    w2 = w2.at[:H, :H].set(params["critic_w2"])
    w2 = w2.at[H:2 * H, H:2 * H].set(params["actor_w2"])

    w3 = jnp.zeros((pw, pw), jnp.float32)
    w3 = w3.at[:H, 0:1].set(params["critic_lin_w"])
    w3 = w3.at[H:2 * H, 1:1 + 2 * A].set(params["actor_w3"])

    bp = jnp.zeros((16, pw), jnp.float32)
    bp = bp.at[0, :H].set(params["critic_b1"][0]).at[0, H:2 * H].set(params["actor_b1"][0])
    bp = bp.at[1, :H].set(params["critic_b2"][0]).at[1, H:2 * H].set(params["actor_b2"][0])
    bp = bp.at[2, 0:1].set(params["critic_lin_b"][0]).at[2, 1:1 + 2 * A].set(params["actor_b3"][0])

    wp = jnp.concatenate([w1, w2, w3, bp], axis=0).astype(jnp.bfloat16)
    return wp, in_pad, pw                                      # (in_pad + 2*pw + 16, pw)


def policy_continuous_forward(x, wp, rnn_hxs=None, *, in_pad, pw, num_actions,
                              block_b=256):
    """MLPBase.forward (non-recurrent) as a single fused Pallas kernel.

    `wp` is the pre-packed bf16 slab from pack_params (packed once, reused).
    Returns (value (B,1), (alpha (B,A), beta (B,A)), rnn_hxs).
    """
    B, num_inputs = x.shape
    if in_pad != num_inputs:
        x = jnp.pad(x, ((0, 0), (0, in_pad - num_inputs)))

    # Batch tiling: one tile at small B; for large batches (many parallel envs)
    # the grid shards across both v7x TensorCores via dimension_semantics.
    bt = min(_round_up(B, 8), block_b)
    b_pad = _round_up(B, bt)
    if b_pad != B:
        x = jnp.pad(x, ((0, b_pad - B), (0, 0)))

    rows = in_pad + 2 * pw + 16
    cost = pl.CostEstimate(
        flops=2 * b_pad * (in_pad * pw + 2 * pw * pw),
        transcendentals=2 * b_pad * pw,                        # softplus = exp + log1p
        bytes_accessed=4 * x.size + 2 * wp.size + 4 * b_pad * pw,
    )

    # Footprint: ~75 KB bf16 weights + (bt,128) f32 in/out tiles, double-buffered
    # -> well under even v5e's 16 MiB scoped-VMEM default for block_b=256.
    kernel = functools.partial(_policy_kernel, in_pad, pw)
    out = pl.pallas_call(
        kernel,
        out_shape=jax.ShapeDtypeStruct((b_pad, pw), jnp.float32),
        grid=(b_pad // bt,),
        in_specs=[pl.BlockSpec((bt, in_pad), lambda i: (i, 0)),
                  pl.BlockSpec((rows, pw), lambda i: (0, 0))],  # weights stay resident
        out_specs=pl.BlockSpec((bt, pw), lambda i: (i, 0)),
        compiler_params=pltpu.CompilerParams(dimension_semantics=("parallel",)),
        cost_estimate=cost,
    )(x, wp)

    value = out[:B, 0:1]
    alpha = out[:B, 1:1 + num_actions]
    beta = out[:B, 1 + num_actions:1 + 2 * num_actions]
    return value, (alpha, beta), rnn_hxs


def init_params(key, num_inputs, num_actions, hidden_size):
    """Deterministic init mirroring the PyTorch module:
    orthogonal(gain=sqrt(2)) weights, zero biases. Weights stored (in, out)."""
    ortho = jax.nn.initializers.orthogonal(scale=np.sqrt(2.0))
    ks = jax.random.split(key, 6)
    return {
        # critic
        "critic_w1": ortho(ks[0], (num_inputs, hidden_size), jnp.float32),
        "critic_b1": jnp.zeros((1, hidden_size), jnp.float32),
        "critic_w2": ortho(ks[1], (hidden_size, hidden_size), jnp.float32),
        "critic_b2": jnp.zeros((1, hidden_size), jnp.float32),
        "critic_lin_w": ortho(ks[2], (hidden_size, 1), jnp.float32),
        "critic_lin_b": jnp.zeros((1, 1), jnp.float32),
        # actor
        "actor_w1": ortho(ks[3], (num_inputs, hidden_size), jnp.float32),
        "actor_b1": jnp.zeros((1, hidden_size), jnp.float32),
        "actor_w2": ortho(ks[4], (hidden_size, hidden_size), jnp.float32),
        "actor_b2": jnp.zeros((1, hidden_size), jnp.float32),
        "actor_w3": ortho(ks[5], (hidden_size, 2 * num_actions), jnp.float32),
        "actor_b3": jnp.zeros((1, 2 * num_actions), jnp.float32),
    }


def reference_forward(x, p, num_actions):
    """Pure-JAX f32 reference of the same forward (sanity check)."""
    h = jax.nn.relu(x @ p["critic_w1"] + p["critic_b1"])
    h = jax.nn.relu(h @ p["critic_w2"] + p["critic_b2"])
    value = h @ p["critic_lin_w"] + p["critic_lin_b"]
    a = jax.nn.relu(x @ p["actor_w1"] + p["actor_b1"])
    a = jax.nn.relu(a @ p["actor_w2"] + p["actor_b2"])
    z = a @ p["actor_w3"] + p["actor_b3"]
    sp = jax.nn.softplus(z) + 1.0
    return value, sp[:, :num_actions], sp[:, num_actions:]


if __name__ == "__main__":
    # Small shapes consistent with the module: obs dim 32, hidden 32, 4 actions.
    B, NUM_INPUTS, HIDDEN, NUM_ACTIONS = 8, 32, 32, 4

    key = jax.random.PRNGKey(0)
    k_x, k_p = jax.random.split(key)
    x = jax.random.normal(k_x, (B, NUM_INPUTS), dtype=jnp.float32)
    params = init_params(k_p, NUM_INPUTS, NUM_ACTIONS, HIDDEN)

    # Pack ONCE (hoisted out of the per-step path); reuse across forward calls.
    wp, in_pad, pw = pack_params(params, NUM_INPUTS, NUM_ACTIONS, HIDDEN)
    wp = jax.block_until_ready(wp)

    # rnn_hxs / masks are passed through untouched in the non-recurrent branch.
    rnn_hxs = jnp.zeros((B, 1), jnp.float32)   # recurrent_hidden_state_size == 1
    masks = jnp.ones((B, 1), jnp.float32)
    # TODO(synk): recurrent=True GRU path (_forward_gru) not implemented — the
    # reference module defaults to recurrent=False and that branch is unused here.

    forward = jax.jit(lambda xx, ww, hh: policy_continuous_forward(
        xx, ww, hh, in_pad=in_pad, pw=pw, num_actions=NUM_ACTIONS))

    value, (alpha, beta), rnn_hxs_out = forward(x, wp, rnn_hxs)
    jax.block_until_ready((value, alpha, beta, rnn_hxs_out))

    # Correctness check against the pure-JAX f32 reference (bf16 weights ->
    # looser tolerance than the previous all-f32 version).
    v_ref, a_ref, b_ref = reference_forward(x, params, NUM_ACTIONS)
    np.testing.assert_allclose(np.asarray(value), np.asarray(v_ref), rtol=3e-2, atol=5e-2)
    np.testing.assert_allclose(np.asarray(alpha), np.asarray(a_ref), rtol=3e-2, atol=5e-2)
    np.testing.assert_allclose(np.asarray(beta), np.asarray(b_ref), rtol=3e-2, atol=5e-2)
    assert bool(jnp.all(alpha >= 1.0)) and bool(jnp.all(beta >= 1.0))  # softplus(x)+1 >= 1

    print("KERNEL_OK")
</pallas_src>

<mosaic_0001>
module attributes {stable_mosaic.version = 11 : i64} {
  func.func @_policy_kernel(%arg0: i32, %arg1: memref<8x32xf32, #tpu.memory_space<vmem>>, %arg2: memref<304x128xbf16, #tpu.memory_space<vmem>>, %arg3: memref<8x128xf32, #tpu.memory_space<vmem>>) attributes {dimension_semantics = [#tpu.dimension_semantics<parallel>], iteration_bounds = array<i64: 1>, scalar_prefetch = 0 : i64, scratch_operands = 0 : i64, tpu.core_type = #tpu.core_type<tc>, window_params = [{transform_indices = @transform_0, window_bounds = array<i64: 8, 32>}, {pipeline_mode = #tpu.pipeline_mode<synchronous>, transform_indices = @transform_1, window_bounds = array<i64: 304, 128>}, {transform_indices = @transform_2, window_bounds = array<i64: 8, 128>}]} {
    %c0 = arith.constant 0 : index
    %c0_0 = arith.constant 0 : index
    %0 = vector.load %arg2[%c0, %c0_0] : memref<304x128xbf16, #tpu.memory_space<vmem>>, vector<32x128xbf16>
    %c32 = arith.constant 32 : index
    %c0_1 = arith.constant 0 : index
    %1 = vector.load %arg2[%c32, %c0_1] : memref<304x128xbf16, #tpu.memory_space<vmem>>, vector<128x128xbf16>
    %c160 = arith.constant 160 : index
    %c0_2 = arith.constant 0 : index
    %2 = vector.load %arg2[%c160, %c0_2] : memref<304x128xbf16, #tpu.memory_space<vmem>>, vector<128x128xbf16>
    %c288 = arith.constant 288 : index
    %c0_3 = arith.constant 0 : index
    %3 = vector.load %arg2[%c288, %c0_3] : memref<304x128xbf16, #tpu.memory_space<vmem>>, vector<16x128xbf16>
    %4 = arith.extf %3 : vector<16x128xbf16> to vector<16x128xf32>
    %5 = vector.extract_strided_slice %4 {offsets = [0, 0], sizes = [1, 128], strides = [1, 1]} : vector<16x128xf32> to vector<1x128xf32>
    %6 = vector.extract_strided_slice %4 {offsets = [1, 0], sizes = [1, 128], strides = [1, 1]} : vector<16x128xf32> to vector<1x128xf32>
    %7 = vector.extract_strided_slice %4 {offsets = [2, 0], sizes = [1, 128], strides = [1, 1]} : vector<16x128xf32> to vector<1x128xf32>
    %c0_4 = arith.constant 0 : index
    %c0_5 = arith.constant 0 : index
    %8 = vector.load %arg1[%c0_4, %c0_5] : memref<8x32xf32, #tpu.memory_space<vmem>>, vector<8x32xf32>
    %9 = arith.truncf %8 : vector<8x32xf32> to vector<8x32xbf16>
    %cst = arith.constant dense<0.000000e+00> : vector<8x128xf32>
    %10 = tpu.matmul %9, %0, %cst {dimension_numbers = #tpu.dot_dimension_numbers<[1], [0], [0], [1], [0, 0, 1, 1], [], []>} : vector<8x32xbf16>, vector<32x128xbf16>, vector<8x128xf32> -> vector<8x128xf32>
    %11 = vector.broadcast %5 : vector<1x128xf32> to vector<8x128xf32>
    %12 = arith.addf %10, %11 : vector<8x128xf32>
    %cst_6 = arith.constant 0.000000e+00 : f32
    %13 = vector.broadcast %cst_6 : f32 to vector<8x128xf32>
    %14 = arith.maximumf %12, %13 : vector<8x128xf32>
    %15 = arith.truncf %14 : vector<8x128xf32> to vector<8x128xbf16>
    %cst_7 = arith.constant dense<0.000000e+00> : vector<8x128xf32>
    %16 = tpu.matmul %15, %1, %cst_7 {dimension_numbers = #tpu.dot_dimension_numbers<[1], [0], [0], [1], [0, 0, 1, 1], [], []>} : vector<8x128xbf16>, vector<128x128xbf16>, vector<8x128xf32> -> vector<8x128xf32>
    %17 = vector.broadcast %6 : vector<1x128xf32> to vector<8x128xf32>
    %18 = arith.addf %16, %17 : vector<8x128xf32>
    %cst_8 = arith.constant 0.000000e+00 : f32
    %19 = vector.broadcast %cst_8 : f32 to vector<8x128xf32>
    %20 = arith.maximumf %18, %19 : vector<8x128xf32>
    %21 = arith.truncf %20 : vector<8x128xf32> to vector<8x128xbf16>
    %cst_9 = arith.constant dense<0.000000e+00> : vector<8x128xf32>
    %22 = tpu.matmul %21, %2, %cst_9 {dimension_numbers = #tpu.dot_dimension_numbers<[1], [0], [0], [1], [0, 0, 1, 1], [], []>} : vector<8x128xbf16>, vector<128x128xbf16>, vector<8x128xf32> -> vector<8x128xf32>
    %23 = vector.broadcast %7 : vector<1x128xf32> to vector<8x128xf32>
    %24 = arith.addf %22, %23 : vector<8x128xf32>
    %cst_10 = arith.constant 0.000000e+00 : f32
    %25 = vector.broadcast %cst_10 : f32 to vector<8x128xf32>
    %26 = arith.maximumf %24, %25 : vector<8x128xf32>
    %27 = vector.broadcast %cst_10 : f32 to vector<8x128xf32>
    %28 = arith.subf %24, %27 : vector<8x128xf32>
    %29 = arith.cmpf one, %28, %28 : vector<8x128xf32>
    %30 = vector.broadcast %cst_10 : f32 to vector<8x128xf32>
    %31 = arith.addf %24, %30 : vector<8x128xf32>
    %32 = math.absf %28 : vector<8x128xf32>
    %cst_11 = arith.constant 0.000000e+00 : f32
    %33 = vector.broadcast %cst_11 : f32 to vector<8x128xf32>
    %34 = arith.subf %33, %32 : vector<8x128xf32>
    %35 = math.exp %34 : vector<8x128xf32>
    %36 = math.log1p %35 : vector<8x128xf32>
    %37 = arith.addf %26, %36 : vector<8x128xf32>
    %38 = arith.select %29, %31, %37 : vector<8x128xi1>, vector<8x128xf32>
    %cst_12 = arith.constant 1.000000e+00 : f32
    %39 = vector.broadcast %cst_12 : f32 to vector<8x128xf32>
    %40 = arith.addf %38, %39 : vector<8x128xf32>
    %41 = tpu.iota {dimensions = array<i32: 1>} : vector<8x128xi32>
    %c0_i32 = arith.constant 0 : i32
    %42 = vector.broadcast %c0_i32 : i32 to vector<8x128xi32>
    %43 = arith.cmpi eq, %41, %42 : vector<8x128xi32>
    %44 = arith.select %43, %24, %40 : vector<8x128xi1>, vector<8x128xf32>
    %c0_13 = arith.constant 0 : index
    %c0_14 = arith.constant 0 : index
    %45 = vector.load %arg3[%c0_13, %c0_14] : memref<8x128xf32, #tpu.memory_space<vmem>>, vector<8x128xf32>
    tpu.vector_store %arg3[%c0_13, %c0_14], %44 {strides = array<i32>} : memref<8x128xf32, #tpu.memory_space<vmem>>, vector<8x128xf32>,
    return
  }
  func.func @transform_0(%arg0: i32) -> (i32, i32) {
    %c0_i32 = arith.constant 0 : i32
    %c0_i32_0 = arith.constant 0 : i32
    return %arg0, %c0_i32 : i32, i32
  }
  func.func @transform_1(%arg0: i32) -> (i32, i32) {
    %c0_i32 = arith.constant 0 : i32
    %c0_i32_0 = arith.constant 0 : i32
    %c0_i32_1 = arith.constant 0 : i32
    return %c0_i32, %c0_i32_0 : i32, i32
  }
  func.func @transform_2(%arg0: i32) -> (i32, i32) {
    %c0_i32 = arith.constant 0 : i32
    %c0_i32_0 = arith.constant 0 : i32
    return %arg0, %c0_i32 : i32, i32
  }
}

</mosaic_0001>

<llo_original>
// kernel: _lambda_.1
$region0: #{_lambda_.1}
  #allocation0 [shape = 'u32[]', space=smem, size = 0x4, offset = 0x4, fixed_abs, tag = 'smem constant byte address 0x4 - core index']
  #allocation1 [shape = 'u32[144,128]{1,0:T(1,128)}', space=vmem, size = 0x12000, scoped, tag = 'internal scratch']
  %s0 = inlined_call_operand.hbm [shape: f32[8,32], index: 0, kind: input, shape index: {}]
  %s1 = inlined_call_operand.hbm [shape: bf16[304,128], index: 1, kind: input, shape index: {}]
  %s2 = inlined_call_operand.vmem [shape: f32[8,128], index: 2, kind: output, shape index: {}]
  %s3 = sld [smem:[#allocation0]]
  $region26: #{_lambda_.1} parent=0
    _
  %s5 = ssub.s32 1, %s3
  %s6 = scalar_select 0, %s5, %s3
  $region1: #{_lambda_.1} parent=0
    #allocation2 [shape = 'u8[4096]{0}', space=vmem, size = 0x1000, scoped, tag = 'input window, operand 0, single buffered']
    #allocation3 [shape = 's32[1]{0}', space=sflag, size = 0x4, scoped, tag = 'scoped memory for _lambda_.1']
    #allocation4 [shape = 'u8[77824]{0}', space=vmem, size = 0x13000, scoped, tag = 'input window, operand 1, single buffered']
    #allocation5 [shape = 's32[1]{0}', space=sflag, size = 0x4, scoped, tag = 'scoped memory for _lambda_.1']
    %7 = vsyncpa [#allocation3], 0
    %8 = vsyncpa [#allocation5], 0
    // Predicated region
    $region2: #{_lambda_.1} parent=1 // pred_check
      _
    $region3: #{_lambda_.1} parent=1 // pred_check_branch
      %10 = sbr.rel (0) target = $region5
    $region4: #{_lambda_.1} parent=1 // pred_region
      %s12 = ssub.s32 128, 128
      %13 = vsyncadd [#allocation3], %s12
      %s15 = sshll.u32 [#allocation2], 4
      %s16 = int_to_ptr.vmem [resolvable:$true] %s15
      %18 = dma.hbm_to_vmem [thread:$0]  %s0, 128, %s16, [#allocation3]
    $region5: #{_lambda_.1} parent=1 // pred_fallthru
      _
    // Predicated region
    $region6: #{_lambda_.1} parent=1 // pred_check
      _
    $region7: #{_lambda_.1} parent=1 // pred_check_branch
      %20 = sbr.rel (0) target = $region9
    $region8: #{_lambda_.1} parent=1 // pred_region
      %s22 = ssub.s32 2432, 2432
      %23 = vsyncadd [#allocation5], %s22
      %s24 = sshll.u32 [#allocation4], 4
      %s25 = int_to_ptr.vmem [resolvable:$true] %s24
      %30 = dma.hbm_to_vmem [thread:$0]  %s1, 2432, %s25, [#allocation5], 64, 64, 4
    $region9: #{_lambda_.1} parent=1 // pred_fallthru
      _
    // Predicated region
    $region10: #{_lambda_.1} parent=1 // pred_check
      _
    $region11: #{_lambda_.1} parent=1 // pred_check_branch
      %32 = sbr.rel (0) target = $region13
    $region12: #{_lambda_.1} parent=1 // pred_region
      %33 = dma.done [#allocation3], 128
    $region13: #{_lambda_.1} parent=1 // pred_fallthru
      _
    // Predicated region
    $region14: #{_lambda_.1} parent=1 // pred_check
      _
    $region15: #{_lambda_.1} parent=1 // pred_check_branch
      %35 = sbr.rel (0) target = $region17
    $region16: #{_lambda_.1} parent=1 // pred_region
      %36 = dma.done [#allocation5], 2432
    $region17: #{_lambda_.1} parent=1 // pred_fallthru
      _
    %v38 = vld [vmem:[#allocation4] sm:$0xf]
    %v39 = vld [vmem:[#allocation4 + $0x4] sm:$0xf]
    %v40 = vld [vmem:[#allocation4 + $0x8] sm:$0xf]
    %v41 = vld [vmem:[#allocation4 + $0xc] sm:$0xf]
    %v42 = vld [vmem:[#allocation4 + $0x10] sm:$0xf]
    %v43 = vld [vmem:[#allocation4 + $0x14] sm:$0xf]
    %v44 = vld [vmem:[#allocation4 + $0x18] sm:$0xf]
    %v45 = vld [vmem:[#allocation4 + $0x1c] sm:$0xf]
    %v46 = vld [vmem:[#allocation4 + $0x20] sm:$0xf]
    %v47 = vld [vmem:[#allocation4 + $0x24] sm:$0xf]
    %v48 = vld [vmem:[#allocation4 + $0x28] sm:$0xf]
    %v49 = vld [vmem:[#allocation4 + $0x2c] sm:$0xf]
    %v50 = vld [vmem:[#allocation4 + $0x30] sm:$0xf]
    %v51 = vld [vmem:[#allocation4 + $0x34] sm:$0xf]
    %v52 = vld [vmem:[#allocation4 + $0x38] sm:$0xf]
    %v53 = vld [vmem:[#allocation4 + $0x3c] sm:$0xf]
    %v54 = vld [vmem:[#allocation4 + $0x40] sm:$0xf]
    %v55 = vld [vmem:[#allocation4 + $0x44] sm:$0xf]
    %v56 = vld [vmem:[#allocation4 + $0x48] sm:$0xf]
    %v57 = vld [vmem:[#allocation4 + $0x4c] sm:$0xf]
    %v58 = vld [vmem:[#allocation4 + $0x50] sm:$0xf]
    %v59 = vld [vmem:[#allocation4 + $0x54] sm:$0xf]
    %v60 = vld [vmem:[#allocation4 + $0x58] sm:$0xf]
    %v61 = vld [vmem:[#allocation4 + $0x5c] sm:$0xf]
    %v62 = vld [vmem:[#allocation4 + $0x60] sm:$0xf]
    %v63 = vld [vmem:[#allocation4 + $0x64] sm:$0xf]
    %v64 = vld [vmem:[#allocation4 + $0x68] sm:$0xf]
    %v65 = vld [vmem:[#allocation4 + $0x6c] sm:$0xf]
    %v66 = vld [vmem:[#allocation4 + $0x70] sm:$0xf]
    %v67 = vld [vmem:[#allocation4 + $0x74] sm:$0xf]
    %v68 = vld [vmem:[#allocation4 + $0x78] sm:$0xf]
    %v69 = vld [vmem:[#allocation4 + $0x7c] sm:$0xf]
    %v70 = vld [vmem:[#allocation4 + $0x80] sm:$0xf]
    %v71 = vld [vmem:[#allocation4 + $0x84] sm:$0xf]
    %v72 = vld [vmem:[#allocation4 + $0x88] sm:$0xf]
    %v73 = vld [vmem:[#allocation4 + $0x8c] sm:$0xf]
    %v74 = vld [vmem:[#allocation4 + $0x90] sm:$0xf]
    %v75 = vunpack.c.l.bf16 %v74
    %v76 = vld [vmem:[#allocation2] sm:$0xff]
    %v77 = vpack.c.bf16 %v76, %v76
    %v78 = vlaneseq
    %v79 = vshrl.u32 %v78, 7
    %v80 = vsub.s32 0, %v79
    %v81 = vrot.slane %v75, %v80
    %v86 = vunpack.c.l.b16 %v38
    %v87 = vunpack.c.l.b16 %v39
    %v88 = vunpack.c.l.b16 %v40
    %v89 = vunpack.c.l.b16 %v41
    %v90 = vpack.c.b16 %v87, %v86
    %v91 = vpack.c.b16 %v89, %v88
    %vm94 = vcmask 261120
    %v96 = vsel %vm94, %v77, 0
    %98 = vmatprep.subr.bf16.mxu0 0
    %99 = vmatpush1.bf16.msra.mxu0 %v90
    %100 = vmatprep.subr.bf16.mxu0 0
    %101 = vmatpush1.bf16.msra.mxu0 %v91
    %102 = vmatprep.subr.bf16.mxu0 0
    %103 = vmatpush1.bf16.msra.mxu0 0
    %104 = vmatprep.subr.bf16.mxu0 0
    %105 = vmatpush1.bf16.msra.mxu0 0
    %106 = vmatprep.subr.bf16.mxu0 0
    %107 = vmatpush1.bf16.msra.mxu0 0
    %108 = vmatprep.subr.bf16.mxu0 0
    %109 = vmatpush1.bf16.msra.mxu0 0
    %110 = vmatprep.subr.bf16.mxu0 0
    %111 = vmatpush1.bf16.msra.mxu0 0
    %112 = vmatprep.subr.bf16.mxu0 0
    %113 = vmatpush1.bf16.msra.mxu0 0
    %114 = vmatprep.subr.bf16.mxu0 0
    %115 = vmatpush1.bf16.msra.mxu0 0
    %116 = vmatprep.subr.bf16.mxu0 0
    %117 = vmatpush1.bf16.msra.mxu0 0
    %118 = vmatprep.subr.bf16.mxu0 0
    %119 = vmatpush1.bf16.msra.mxu0 0
    %120 = vmatprep.subr.bf16.mxu0 0
    %121 = vmatpush1.bf16.msra.mxu0 0
    %122 = vmatprep.subr.bf16.mxu0 0
    %123 = vmatpush1.bf16.msra.mxu0 0
    %124 = vmatprep.subr.bf16.mxu0 0
    %125 = vmatpush1.bf16.msra.mxu0 0
    %126 = vmatprep.subr.bf16.mxu0 0
    %127 = vmatpush1.bf16.msra.mxu0 0
    %128 = vmatprep.subr.bf16.mxu0 0
    %129 = vmatpush1.bf16.msra.mxu0 0
    %130 = vmatprep.mubr.bf16.mxu0 0
    %131 = vmatmul.mubr.bf16.gmra.mrb[0].mxu0 %v96
    %v132 = vpop.f32.mrb[0].mxu0
    %v133 = vadd.f32 %v81, %v132
    %v134 = vpop.f32.mrb[0].mxu0
    %v135 = vpop.f32.mrb[0].mxu0
    %v136 = vpop.f32.mrb[0].mxu0
    %137 = vdwg.mxu0
    %v138 = vmax.f32 %v133, 0.0
    %v139 = vpack.c.bf16 %v138, %v138
    %v140 = vlaneseq
    %v141 = vshrl.u32 %v140, 7
    %v142 = vsub.s32 1, %v141
    %v143 = vrot.slane %v75, %v142
    %v160 = vunpack.c.l.b16 %v42
    %v161 = vunpack.c.l.b16 %v43
    %v162 = vunpack.c.l.b16 %v44
    %v163 = vunpack.c.l.b16 %v45
    %v164 = vunpack.c.l.b16 %v46
    %v165 = vunpack.c.l.b16 %v47
    %v166 = vunpack.c.l.b16 %v48
    %v167 = vunpack.c.l.b16 %v49
    %v168 = vunpack.c.l.b16 %v50
    %v169 = vunpack.c.l.b16 %v51
    %v170 = vunpack.c.l.b16 %v52
    %v171 = vunpack.c.l.b16 %v53
    %v172 = vunpack.c.l.b16 %v54
    %v173 = vunpack.c.l.b16 %v55
    %v174 = vunpack.c.l.b16 %v56
    %v175 = vunpack.c.l.b16 %v57
    %v176 = vpack.c.b16 %v161, %v160
    %v177 = vpack.c.b16 %v163, %v162
    %v178 = vpack.c.b16 %v165, %v164
    %v179 = vpack.c.b16 %v167, %v166
    %v180 = vpack.c.b16 %v169, %v168
    %v181 = vpack.c.b16 %v171, %v170
    %v182 = vpack.c.b16 %v173, %v172
    %v183 = vpack.c.b16 %v175, %v174
    %192 = vmatprep.subr.bf16.mxu0 0
    %193 = vmatpush1.bf16.msra.mxu0 %v176
    %194 = vmatprep.subr.bf16.mxu0 0
    %195 = vmatpush1.bf16.msra.mxu0 %v177
    %196 = vmatprep.subr.bf16.mxu0 0
    %197 = vmatpush1.bf16.msra.mxu0 %v178
    %198 = vmatprep.subr.bf16.mxu0 0
    %199 = vmatpush1.bf16.msra.mxu0 %v179
    %200 = vmatprep.subr.bf16.mxu0 0
    %201 = vmatpush1.bf16.msra.mxu0 %v180
    %202 = vmatprep.subr.bf16.mxu0 0
    %203 = vmatpush1.bf16.msra.mxu0 %v181
    %204 = vmatprep.subr.bf16.mxu0 0
    %205 = vmatpush1.bf16.msra.mxu0 %v182
    %206 = vmatprep.subr.bf16.mxu0 0
    %207 = vmatpush1.bf16.msra.mxu0 %v183
    %208 = vmatprep.subr.bf16.mxu0 0
    %209 = vmatpush1.bf16.msra.mxu0 0
    %210 = vmatprep.subr.bf16.mxu0 0
    %211 = vmatpush1.bf16.msra.mxu0 0
    %212 = vmatprep.subr.bf16.mxu0 0
    %213 = vmatpush1.bf16.msra.mxu0 0
    %214 = vmatprep.subr.bf16.mxu0 0
    %215 = vmatpush1.bf16.msra.mxu0 0
    %216 = vmatprep.subr.bf16.mxu0 0
    %217 = vmatpush1.bf16.msra.mxu0 0
    %218 = vmatprep.subr.bf16.mxu0 0
    %219 = vmatpush1.bf16.msra.mxu0 0
    %220 = vmatprep.subr.bf16.mxu0 0
    %221 = vmatpush1.bf16.msra.mxu0 0
    %222 = vmatprep.subr.bf16.mxu0 0
    %223 = vmatpush1.bf16.msra.mxu0 0
    %224 = vmatprep.mubr.bf16.mxu0 0
    %225 = vmatmul.mubr.bf16.gmra.mrb[0].mxu0 %v139
    %v226 = vpop.f32.mrb[0].mxu0
    %v227 = vadd.f32 %v143, %v226
    %v228 = vpop.f32.mrb[0].mxu0
    %v229 = vpop.f32.mrb[0].mxu0
    %v230 = vpop.f32.mrb[0].mxu0
    %231 = vdwg.mxu0
    %v232 = vmax.f32 %v227, 0.0
    %v233 = vpack.c.bf16 %v232, %v232
    %v234 = vlaneseq
    %v235 = vshrl.u32 %v234, 7
    %v236 = vsub.s32 2, %v235
    %v237 = vrot.slane %v75, %v236
    %v254 = vunpack.c.l.b16 %v58
    %v255 = vunpack.c.l.b16 %v59
    %v256 = vunpack.c.l.b16 %v60
    %v257 = vunpack.c.l.b16 %v61
    %v258 = vunpack.c.l.b16 %v62
    %v259 = vunpack.c.l.b16 %v63
    %v260 = vunpack.c.l.b16 %v64
    %v261 = vunpack.c.l.b16 %v65
    %v262 = vunpack.c.l.b16 %v66
    %v263 = vunpack.c.l.b16 %v67
    %v264 = vunpack.c.l.b16 %v68
    %v265 = vunpack.c.l.b16 %v69
    %v266 = vunpack.c.l.b16 %v70
    %v267 = vunpack.c.l.b16 %v71
    %v268 = vunpack.c.l.b16 %v72
    %v269 = vunpack.c.l.b16 %v73
    %v270 = vpack.c.b16 %v255, %v254
    %v271 = vpack.c.b16 %v257, %v256
    %v272 = vpack.c.b16 %v259, %v258
    %v273 = vpack.c.b16 %v261, %v260
    %v274 = vpack.c.b16 %v263, %v262
    %v275 = vpack.c.b16 %v265, %v264
    %v276 = vpack.c.b16 %v267, %v266
    %v277 = vpack.c.b16 %v269, %v268
    %286 = vmatprep.subr.bf16.mxu0 0
    %287 = vmatpush1.bf16.msra.mxu0 %v270
    %288 = vmatprep.subr.bf16.mxu0 0
    %289 = vmatpush1.bf16.msra.mxu0 %v271
    %290 = vmatprep.subr.bf16.mxu0 0
    %291 = vmatpush1.bf16.msra.mxu0 %v272
    %292 = vmatprep.subr.bf16.mxu0 0
    %293 = vmatpush1.bf16.msra.mxu0 %v273
    %294 = vmatprep.subr.bf16.mxu0 0
    %295 = vmatpush1.bf16.msra.mxu0 %v274
    %296 = vmatprep.subr.bf16.mxu0 0
    %297 = vmatpush1.bf16.msra.mxu0 %v275
    %298 = vmatprep.subr.bf16.mxu0 0
    %299 = vmatpush1.bf16.msra.mxu0 %v276
    %300 = vmatprep.subr.bf16.mxu0 0
    %301 = vmatpush1.bf16.msra.mxu0 %v277
    %302 = vmatprep.subr.bf16.mxu0 0
    %303 = vmatpush1.bf16.msra.mxu0 0
    %304 = vmatprep.subr.bf16.mxu0 0
    %305 = vmatpush1.bf16.msra.mxu0 0
    %306 = vmatprep.subr.bf16.mxu0 0
    %307 = vmatpush1.bf16.msra.mxu0 0
    %308 = vmatprep.subr.bf16.mxu0 0
    %309 = vmatpush1.bf16.msra.mxu0 0
    %310 = vmatprep.subr.bf16.mxu0 0
    %311 = vmatpush1.bf16.msra.mxu0 0
    %312 = vmatprep.subr.bf16.mxu0 0
    %313 = vmatpush1.bf16.msra.mxu0 0
    %314 = vmatprep.subr.bf16.mxu0 0
    %315 = vmatpush1.bf16.msra.mxu0 0
    %316 = vmatprep.subr.bf16.mxu0 0
    %317 = vmatpush1.bf16.msra.mxu0 0
    %318 = vmatprep.mubr.bf16.mxu0 0
    %319 = vmatmul.mubr.bf16.gmra.mrb[0].mxu0 %v233
    %v320 = vpop.f32.mrb[0].mxu0
    %v321 = vadd.f32 %v237, %v320
    %v322 = vpop.f32.mrb[0].mxu0
    %v323 = vpop.f32.mrb[0].mxu0
    %v324 = vpop.f32.mrb[0].mxu0
    %325 = vdwg.mxu0
    %v326 = vmax.f32 %v321, 0.0
    %vm327 = vcmp.ne.f32.partialorder %v321, %v321
    %v328 = vadd.f32 %v321, 0.0
    %v329 = vand.u32 2147483647, %v321
    %v330 = vsub.f32 0.0, %v329
    %v331 = vmul.f32 %v330, 1.442695
    %v332 = vpow.pop %v331
    %v333 = vadd.f32 %v332, 1.0
    %v334 = vlog2.pop %v333
    %v335 = vmul.f32 %v334, 0.6931472
    %v336 = vmul.f32 -0.5, %v332
    %v337 = vadd.f32 %v336, 1.0
    %v338 = vmul.f32 %v337, %v332
    %v339 = vand.u32 2147483647, %v332
    %vm340 = vcmp.lt.f32.partialorder %v339, 0.0004427343
    %v341 = vsel %vm340, %v338, %v335
    %v342 = vadd.f32 %v326, %v341
    %v343 = vsel %vm327, %v328, %v342
    %v344 = vadd.f32 %v343, 1.0
    %v345 = vlaneseq
    %v346 = vand.u32 %v345, 127
    %vm347 = vcmp.eq.s32.totalorder %v346, 0
    %v348 = vsel %vm347, %v321, %v344
    %349 = vst [vmem:[%s2] sm:$0xff] %v348
    // Predicated region
    $region18: #{_lambda_.1} parent=1 // pred_check
      _
    $region19: #{_lambda_.1} parent=1 // pred_check_branch
      %351 = sbr.rel (0) target = $region21
    $region20: #{_lambda_.1} parent=1 // pred_region
      _
    $region21: #{_lambda_.1} parent=1 // pred_fallthru
      _
    // Predicated region
    $region22: #{_lambda_.1} parent=1 // pred_check
      _
    $region23: #{_lambda_.1} parent=1 // pred_check_branch
      %353 = sbr.rel (0) target = $region25
    $region24: #{_lambda_.1} parent=1 // pred_region
      _
    $region25: #{_lambda_.1} parent=1 // pred_fallthru
      _
    %354 = vsyncpa [#allocation3], 1
    %355 = vsyncpa [#allocation5], 1

</llo_original>
